<compile_context>
chip_gen: v7x
topology: tpu7x:2x2x1
jax: 0.10.0
libtpu: 0.0.40
codegen_flags: <defaults>
</compile_context>

<pallas_src>
import functools

import jax
import jax.numpy as jnp
from jax.experimental import pallas as pl
from jax.experimental.pallas import tpu as pltpu


def _gauss_kernel(x_ref, t_ref, o_ref, *, inv_two_sigma_sq):
    # x_ref: (D, 1)   t_ref: (D, TN)   o_ref: (1, TN)
    diff = t_ref[...] - x_ref[...]                           # broadcast -> (D, TN)
    sq_dist = jnp.sum(diff * diff, axis=0, keepdims=True)    # sublane reduce -> (1, TN)
    o_ref[...] = jnp.exp(-sq_dist * inv_two_sigma_sq)


def gauss_layer(x, training_inputs, sigma, *, tile_n=1024):
    """x: (1, D) float32; training_inputs: (N, D) float32; returns (N,) float32.

    Note: sigma is baked in as a Python float at trace time (matches the
    PyTorch module where sigma is a fixed constructor arg).
    """
    N, D = training_inputs.shape
    assert x.shape == (1, D)

    # Lane-dense tiling: tile N along the lane axis in multiples of 128,
    # clamped so small problems use a single (or few) block(s).
    tile_n = max(128, min(int(tile_n), pl.cdiv(N, 128) * 128))
    n_pad = pl.cdiv(N, tile_n) * tile_n

    # Transpose to (D, N): N on lanes, D on sublanes.  Pad N up to n_pad.
    t_t = training_inputs.T                                   # (D, N)
    if n_pad != N:
        t_t = jnp.pad(t_t, ((0, 0), (0, n_pad - N)))          # (D, n_pad)
    x_t = x.T                                                 # (D, 1)

    inv_two_sigma_sq = 1.0 / (2.0 * float(sigma) ** 2)
    kernel = functools.partial(_gauss_kernel, inv_two_sigma_sq=inv_two_sigma_sq)

    out = pl.pallas_call(
        kernel,
        out_shape=jax.ShapeDtypeStruct((1, n_pad), jnp.float32),
        grid_spec=pl.GridSpec(
            grid=(n_pad // tile_n,),
            in_specs=[
                pl.BlockSpec((D, 1), lambda i: (0, 0)),        # query x, replicated
                pl.BlockSpec((D, tile_n), lambda i: (0, i)),   # training-input slab
            ],
            out_specs=pl.BlockSpec((1, tile_n), lambda i: (0, i)),
        ),
        compiler_params=pltpu.CompilerParams(
            dimension_semantics=("parallel",),
        ),
    )(x_t, t_t)

    return out[0, :N]  # (N,) — matches PyTorch `.sum(axis=1)` result shape


def gauss_layer_ref(x, training_inputs, sigma):
    diff = x - training_inputs
    sq = jnp.sum(diff * diff, axis=1)
    return jnp.exp(-sq / (2.0 * sigma ** 2))


if __name__ == "__main__":
    key = jax.random.PRNGKey(0)
    k1, k2, k3 = jax.random.split(key, 3)

    sigma = 0.5

    # Case 1: small, "nice" shapes (64 stored training samples, 16 features).
    N1, D = 64, 16
    training_inputs = jax.random.normal(k1, (N1, D), dtype=jnp.float32)
    x = jax.random.normal(k2, (1, D), dtype=jnp.float32)

    out = gauss_layer(x, training_inputs, sigma)
    out = jax.block_until_ready(out)
    ref = gauss_layer_ref(x, training_inputs, sigma)
    assert out.shape == (N1,)
    assert jnp.allclose(out, ref, atol=1e-5, rtol=1e-5)

    # Case 2: N not a multiple of 128 — exercises the padding path.
    N2 = 300
    training_inputs2 = jax.random.normal(k3, (N2, D), dtype=jnp.float32)
    out2 = gauss_layer(x, training_inputs2, sigma)
    out2 = jax.block_until_ready(out2)
    ref2 = gauss_layer_ref(x, training_inputs2, sigma)
    assert out2.shape == (N2,)
    assert jnp.allclose(out2, ref2, atol=1e-5, rtol=1e-5)

    print("KERNEL_OK")
</pallas_src>

<mosaic_0001>
module attributes {stable_mosaic.version = 11 : i64} {
  func.func @_gauss_kernel(%arg0: i32, %arg1: memref<16x1xf32, #tpu.memory_space<vmem>>, %arg2: memref<16x128xf32, #tpu.memory_space<vmem>>, %arg3: memref<1x128xf32, #tpu.memory_space<vmem>>) attributes {dimension_semantics = [#tpu.dimension_semantics<parallel>], iteration_bounds = array<i64: 1>, scalar_prefetch = 0 : i64, scratch_operands = 0 : i64, tpu.core_type = #tpu.core_type<tc>, window_params = [{pipeline_mode = #tpu.pipeline_mode<synchronous>, transform_indices = @transform_0, window_bounds = array<i64: 16, 1>}, {transform_indices = @transform_1, window_bounds = array<i64: 16, 128>}, {transform_indices = @transform_2, window_bounds = array<i64: 1, 128>}]} {
    %c0 = arith.constant 0 : index
    %c0_0 = arith.constant 0 : index
    %0 = vector.load %arg2[%c0, %c0_0] : memref<16x128xf32, #tpu.memory_space<vmem>>, vector<16x128xf32>
    %c0_1 = arith.constant 0 : index
    %c0_2 = arith.constant 0 : index
    %1 = vector.load %arg1[%c0_1, %c0_2] : memref<16x1xf32, #tpu.memory_space<vmem>>, vector<16x1xf32>
    %2 = vector.broadcast %1 : vector<16x1xf32> to vector<16x128xf32>
    %3 = arith.subf %0, %2 : vector<16x128xf32>
    %4 = arith.mulf %3, %3 : vector<16x128xf32>
    %cst = arith.constant dense<0.000000e+00> : vector<128xf32>
    %5 = vector.multi_reduction <add>, %4, %cst [0] : vector<16x128xf32> to vector<128xf32>
    %6 = vector.shape_cast %5 : vector<128xf32> to vector<1x128xf32>
    %cst_3 = arith.constant 0.000000e+00 : f32
    %7 = vector.broadcast %cst_3 : f32 to vector<1x128xf32>
    %8 = arith.subf %7, %6 : vector<1x128xf32>
    %cst_4 = arith.constant 2.000000e+00 : f32
    %9 = vector.broadcast %cst_4 : f32 to vector<1x128xf32>
    %10 = arith.mulf %8, %9 : vector<1x128xf32>
    %11 = math.exp %10 : vector<1x128xf32>
    %c0_5 = arith.constant 0 : index
    %c0_6 = arith.constant 0 : index
    %12 = vector.load %arg3[%c0_5, %c0_6] : memref<1x128xf32, #tpu.memory_space<vmem>>, vector<1x128xf32>
    tpu.vector_store %arg3[%c0_5, %c0_6], %11 {strides = array<i32>} : memref<1x128xf32, #tpu.memory_space<vmem>>, vector<1x128xf32>,
    return
  }
  func.func @transform_0(%arg0: i32) -> (i32, i32) {
    %c0_i32 = arith.constant 0 : i32
    %c0_i32_0 = arith.constant 0 : i32
    %c0_i32_1 = arith.constant 0 : i32
    return %c0_i32, %c0_i32_0 : i32, i32
  }
  func.func @transform_1(%arg0: i32) -> (i32, i32) {
    %c0_i32 = arith.constant 0 : i32
    %c0_i32_0 = arith.constant 0 : i32
    return %c0_i32, %arg0 : i32, i32
  }
  func.func @transform_2(%arg0: i32) -> (i32, i32) {
    %c0_i32 = arith.constant 0 : i32
    %c0_i32_0 = arith.constant 0 : i32
    return %c0_i32, %arg0 : i32, i32
  }
}

</mosaic_0001>

<llo_original>
// kernel: tpu_custom_call.1
$region0: #{tpu_custom_call.1}
  #allocation0 [shape = 'u32[]', space=smem, size = 0x4, offset = 0x4, fixed_abs, tag = 'smem constant byte address 0x4 - core index']
  #allocation1 [shape = 'u32[144,128]{1,0:T(1,128)}', space=vmem, size = 0x12000, scoped, tag = 'internal scratch']
  %s0 = inlined_call_operand.vmem [shape: f32[16,1], index: 0, kind: input, shape index: {}]
  %s1 = inlined_call_operand.vmem [shape: f32[16,128], index: 1, kind: input, shape index: {}]
  %s2 = inlined_call_operand.hbm [shape: f32[1,128], index: 2, kind: output, shape index: {}]
  %s3 = sld [smem:[#allocation0]]
  $region18: #{tpu_custom_call.1} parent=0
    _
  %s5 = ssub.s32 1, %s3
  %s6 = scalar_select 0, %s5, %s3
  $region1: #{tpu_custom_call.1} parent=0
    #allocation2 [shape = 'u8[512]{0}', space=vmem, size = 0x400, scoped, tag = 'output window, operand 0, single buffered']
    #allocation3 [shape = 's32[1]{0}', space=sflag, size = 0x4, scoped, tag = 'scoped memory for tpu_custom_call.1']
    %7 = vsyncpa [#allocation3], 0
    // Predicated region
    $region2: #{tpu_custom_call.1} parent=1 // pred_check
      _
    $region3: #{tpu_custom_call.1} parent=1 // pred_check_branch
      %9 = sbr.rel (0) target = $region5
    $region4: #{tpu_custom_call.1} parent=1 // pred_region
      _
    $region5: #{tpu_custom_call.1} parent=1 // pred_fallthru
      _
    // Predicated region
    $region6: #{tpu_custom_call.1} parent=1 // pred_check
      _
    $region7: #{tpu_custom_call.1} parent=1 // pred_check_branch
      %11 = sbr.rel (0) target = $region9
    $region8: #{tpu_custom_call.1} parent=1 // pred_region
      _
    $region9: #{tpu_custom_call.1} parent=1 // pred_fallthru
      _
    %v12 = vld [vmem:[%s1] sm:$0xff]
    %v13 = vld [vmem:[%s1 + $0x8] sm:$0xff]
    %v14 = vld [vmem:[%s0] sm:$0xff]
    %v15 = vld [vmem:[%s0 + $0x8] sm:$0xff]
    %17 = vset.pattern.permute.xlu0 0
    %18 = vperm.xlu0 %17, %v14
    %v19 = vpop.permute.xlu0 %18
    %22 = vset.pattern.permute.xlu0 0
    %23 = vperm.xlu0 %22, %v15
    %v24 = vpop.permute.xlu0 %23
    %v26 = vsub.f32 %v12, %v19
    %v27 = vsub.f32 %v13, %v24
    %v28 = vmul.f32 %v26, %v26
    %v29 = vmul.f32 %v27, %v27
    %v30 = vadd.f32 %v28, %v29
    %v31 = vrot.slane %v30, 4
    %v32 = vadd.f32 %v30, %v31
    %v33 = vrot.slane %v32, 2
    %v34 = vadd.f32 %v32, %v33
    %v35 = vrot.slane %v34, 1
    %v36 = vadd.f32 %v34, %v35
    %v37 = vsub.f32 0.0, %v36
    %v38 = vmul.f32 %v37, 2.0
    %v39 = vmul.f32 %v38, 1.442695
    %v40 = vpow.pop %v39
    %41 = vst [vmem:[#allocation2] sm:$0x1] %v40
    // Predicated region
    $region10: #{tpu_custom_call.1} parent=1 // pred_check
      _
    $region11: #{tpu_custom_call.1} parent=1 // pred_check_branch
      %43 = sbr.rel (0) target = $region13
    $region12: #{tpu_custom_call.1} parent=1 // pred_region
      %s45 = ssub.s32 16, 16
      %46 = vsyncadd [#allocation3], %s45
      %s48 = sshll.u32 [#allocation2], 4
      %s49 = int_to_ptr.vmem [resolvable:$true] %s48
      %51 = dma.vmem_to_hbm [thread:$0]  %s49, 16, %s2, [#allocation3]
    $region13: #{tpu_custom_call.1} parent=1 // pred_fallthru
      _
    // Predicated region
    $region14: #{tpu_custom_call.1} parent=1 // pred_check
      _
    $region15: #{tpu_custom_call.1} parent=1 // pred_check_branch
      %53 = sbr.rel (0) target = $region17
    $region16: #{tpu_custom_call.1} parent=1 // pred_region
      %54 = dma.done [#allocation3], 16
    $region17: #{tpu_custom_call.1} parent=1 // pred_fallthru
      _
    %55 = vsyncpa [#allocation3], 1

</llo_original>
